<compile_context>
chip_gen: v7x
topology: tpu7x:2x2x1
jax: 0.10.0
libtpu: 0.0.40
codegen_flags: <defaults>
</compile_context>

<pallas_src>
import jax
import jax.numpy as jnp
from jax.experimental import pallas as pl
from jax.experimental.pallas import tpu as pltpu


def _conv1x1_kernel(w_ref, b_ref, x_ref, o_ref):
    # w_ref: (C,)      f32 SMEM -- 1x1 conv weights (out_channels = 1)
    # b_ref: (1,)      f32 SMEM -- bias
    # x_ref: (N*C, HW) f32 VMEM -- dense 8-sublane input tile
    # o_ref: (N, HW)   f32 VMEM -- lane-dense output
    N, _ = o_ref.shape
    C = x_ref.shape[0] // N
    b = b_ref[0]
    for n in range(N):  # tiny, fully unrolled (N*C = 8 rows)
        base = n * C
        # Two independent partial accumulators -> shorter VALU dep chain.
        acc0 = x_ref[base + 0, :] * w_ref[0]
        if C > 1:
            acc1 = x_ref[base + 1, :] * w_ref[1]
        else:
            acc1 = jnp.zeros_like(acc0)
        for c in range(2, C):
            if c % 2 == 0:
                acc0 = acc0 + x_ref[base + c, :] * w_ref[c]
            else:
                acc1 = acc1 + x_ref[base + c, :] * w_ref[c]
        o_ref[n, :] = acc0 + acc1 + b


def net_forward(x, weight, bias, imgsize):
    """Pallas equivalent of Net.forward.

    x:      (N, C, H, W) float32  (NCHW, same as PyTorch)
    weight: (1, C, 1, 1) float32  (nn.Conv2d(C, 1, 1, 1, 0).weight)
    bias:   (1,)         float32
    returns (N, imgsize*imgsize) float32
    """
    N, C, H, W = x.shape
    assert H == imgsize and W == imgsize
    HW = H * W

    # Contiguous views only -- no pad, no transpose, no extra XLA memory ops.
    x_flat = x.reshape(N * C, HW).astype(jnp.float32)
    w1d = weight.reshape(C).astype(jnp.float32)
    b1d = bias.reshape(1).astype(jnp.float32)

    out = pl.pallas_call(
        _conv1x1_kernel,
        out_shape=jax.ShapeDtypeStruct((N, HW), jnp.float32),
        in_specs=[
            pl.BlockSpec(memory_space=pltpu.MemorySpace.SMEM),  # weight (C,)
            pl.BlockSpec(memory_space=pltpu.MemorySpace.SMEM),  # bias (1,)
            pl.BlockSpec(memory_space=pltpu.MemorySpace.VMEM),  # x (N*C, HW)
        ],
        out_specs=pl.BlockSpec(memory_space=pltpu.MemorySpace.VMEM),
        cost_estimate=pl.CostEstimate(
            flops=2 * N * C * HW,
            transcendentals=0,
            bytes_accessed=4 * (N * C * HW + N * HW + C + 1),
        ),
    )(w1d, b1d, x_flat)
    # TODO(synk): for large N/imgsize, add a lane-dim grid axis (>=512-lane
    # blocks, dimension_semantics=("parallel",)) to overlap DMA with the VPU
    # reduction and shard across v7x's two TensorCores.
    return out


if __name__ == "__main__":
    # Small shapes consistent with the module: batch=2, channels=4, imgsize=16.
    N, C, IMG = 2, 4, 16
    key = jax.random.PRNGKey(0)
    kx, kw, kb = jax.random.split(key, 3)

    x = jax.random.normal(kx, (N, C, IMG, IMG), dtype=jnp.float32)
    # Deterministic parameter init (shapes match nn.Conv2d(C, 1, 1, 1, 0)).
    fan_in = C * 1 * 1
    bound = 1.0 / jnp.sqrt(fan_in)
    weight = jax.random.uniform(kw, (1, C, 1, 1), jnp.float32, -bound, bound)
    bias = jax.random.uniform(kb, (1,), jnp.float32, -bound, bound)

    out = net_forward(x, weight, bias, IMG)
    out = jax.block_until_ready(out)

    # Reference check (pure JAX): 1x1 conv == channel contraction, then flatten.
    ref = jnp.einsum("nchw,c->nhw", x, weight.reshape(C)) + bias[0]
    ref = ref.reshape(N, IMG * IMG)
    assert out.shape == (N, IMG * IMG)
    assert jnp.allclose(out, ref, atol=1e-5, rtol=1e-5)

    print("KERNEL_OK")
</pallas_src>

<mosaic_0001>
module attributes {stable_mosaic.version = 11 : i64} {
  func.func @_conv1x1_kernel(%arg0: memref<4xf32, #tpu.memory_space<smem>>, %arg1: memref<1xf32, #tpu.memory_space<smem>>, %arg2: memref<8x256xf32, #tpu.memory_space<vmem>>, %arg3: memref<2x256xf32, #tpu.memory_space<vmem>>) attributes {dimension_semantics = [], scalar_prefetch = 0 : i64, scratch_operands = 0 : i64, tpu.core_type = #tpu.core_type<tc>} {
    %c0 = arith.constant 0 : index
    %0 = memref.load %arg1[%c0] : memref<1xf32, #tpu.memory_space<smem>>
    %c0_0 = arith.constant 0 : index
    %c0_1 = arith.constant 0 : index
    %1 = vector.load %arg2[%c0_0, %c0_1] : memref<8x256xf32, #tpu.memory_space<vmem>>, vector<1x256xf32>
    %2 = vector.shape_cast %1 : vector<1x256xf32> to vector<256xf32>
    %c0_2 = arith.constant 0 : index
    %3 = memref.load %arg0[%c0_2] : memref<4xf32, #tpu.memory_space<smem>>
    %4 = vector.broadcast %3 : f32 to vector<256xf32>
    %5 = arith.mulf %2, %4 : vector<256xf32>
    %c1 = arith.constant 1 : index
    %c0_3 = arith.constant 0 : index
    %6 = vector.load %arg2[%c1, %c0_3] : memref<8x256xf32, #tpu.memory_space<vmem>>, vector<1x256xf32>
    %7 = vector.shape_cast %6 : vector<1x256xf32> to vector<256xf32>
    %c1_4 = arith.constant 1 : index
    %8 = memref.load %arg0[%c1_4] : memref<4xf32, #tpu.memory_space<smem>>
    %9 = vector.broadcast %8 : f32 to vector<256xf32>
    %10 = arith.mulf %7, %9 : vector<256xf32>
    %c2 = arith.constant 2 : index
    %c0_5 = arith.constant 0 : index
    %11 = vector.load %arg2[%c2, %c0_5] : memref<8x256xf32, #tpu.memory_space<vmem>>, vector<1x256xf32>
    %12 = vector.shape_cast %11 : vector<1x256xf32> to vector<256xf32>
    %c2_6 = arith.constant 2 : index
    %13 = memref.load %arg0[%c2_6] : memref<4xf32, #tpu.memory_space<smem>>
    %14 = vector.broadcast %13 : f32 to vector<256xf32>
    %15 = arith.mulf %12, %14 : vector<256xf32>
    %16 = arith.addf %5, %15 : vector<256xf32>
    %c3 = arith.constant 3 : index
    %c0_7 = arith.constant 0 : index
    %17 = vector.load %arg2[%c3, %c0_7] : memref<8x256xf32, #tpu.memory_space<vmem>>, vector<1x256xf32>
    %18 = vector.shape_cast %17 : vector<1x256xf32> to vector<256xf32>
    %c3_8 = arith.constant 3 : index
    %19 = memref.load %arg0[%c3_8] : memref<4xf32, #tpu.memory_space<smem>>
    %20 = vector.broadcast %19 : f32 to vector<256xf32>
    %21 = arith.mulf %18, %20 : vector<256xf32>
    %22 = arith.addf %10, %21 : vector<256xf32>
    %23 = arith.addf %16, %22 : vector<256xf32>
    %24 = vector.broadcast %0 : f32 to vector<256xf32>
    %25 = arith.addf %23, %24 : vector<256xf32>
    %c0_9 = arith.constant 0 : index
    %c0_10 = arith.constant 0 : index
    %26 = vector.load %arg3[%c0_9, %c0_10] : memref<2x256xf32, #tpu.memory_space<vmem>>, vector<1x256xf32>
    %27 = vector.shape_cast %26 : vector<1x256xf32> to vector<256xf32>
    %28 = vector.shape_cast %25 : vector<256xf32> to vector<1x256xf32>
    tpu.vector_store %arg3[%c0_9, %c0_10], %28 {strides = array<i32>} : memref<2x256xf32, #tpu.memory_space<vmem>>, vector<1x256xf32>,
    %c4 = arith.constant 4 : index
    %c0_11 = arith.constant 0 : index
    %29 = vector.load %arg2[%c4, %c0_11] : memref<8x256xf32, #tpu.memory_space<vmem>>, vector<1x256xf32>
    %30 = vector.shape_cast %29 : vector<1x256xf32> to vector<256xf32>
    %c0_12 = arith.constant 0 : index
    %31 = memref.load %arg0[%c0_12] : memref<4xf32, #tpu.memory_space<smem>>
    %32 = vector.broadcast %31 : f32 to vector<256xf32>
    %33 = arith.mulf %30, %32 : vector<256xf32>
    %c5 = arith.constant 5 : index
    %c0_13 = arith.constant 0 : index
    %34 = vector.load %arg2[%c5, %c0_13] : memref<8x256xf32, #tpu.memory_space<vmem>>, vector<1x256xf32>
    %35 = vector.shape_cast %34 : vector<1x256xf32> to vector<256xf32>
    %c1_14 = arith.constant 1 : index
    %36 = memref.load %arg0[%c1_14] : memref<4xf32, #tpu.memory_space<smem>>
    %37 = vector.broadcast %36 : f32 to vector<256xf32>
    %38 = arith.mulf %35, %37 : vector<256xf32>
    %c6 = arith.constant 6 : index
    %c0_15 = arith.constant 0 : index
    %39 = vector.load %arg2[%c6, %c0_15] : memref<8x256xf32, #tpu.memory_space<vmem>>, vector<1x256xf32>
    %40 = vector.shape_cast %39 : vector<1x256xf32> to vector<256xf32>
    %c2_16 = arith.constant 2 : index
    %41 = memref.load %arg0[%c2_16] : memref<4xf32, #tpu.memory_space<smem>>
    %42 = vector.broadcast %41 : f32 to vector<256xf32>
    %43 = arith.mulf %40, %42 : vector<256xf32>
    %44 = arith.addf %33, %43 : vector<256xf32>
    %c7 = arith.constant 7 : index
    %c0_17 = arith.constant 0 : index
    %45 = vector.load %arg2[%c7, %c0_17] : memref<8x256xf32, #tpu.memory_space<vmem>>, vector<1x256xf32>
    %46 = vector.shape_cast %45 : vector<1x256xf32> to vector<256xf32>
    %c3_18 = arith.constant 3 : index
    %47 = memref.load %arg0[%c3_18] : memref<4xf32, #tpu.memory_space<smem>>
    %48 = vector.broadcast %47 : f32 to vector<256xf32>
    %49 = arith.mulf %46, %48 : vector<256xf32>
    %50 = arith.addf %38, %49 : vector<256xf32>
    %51 = arith.addf %44, %50 : vector<256xf32>
    %52 = vector.broadcast %0 : f32 to vector<256xf32>
    %53 = arith.addf %51, %52 : vector<256xf32>
    %c1_19 = arith.constant 1 : index
    %c0_20 = arith.constant 0 : index
    %54 = vector.load %arg3[%c1_19, %c0_20] : memref<2x256xf32, #tpu.memory_space<vmem>>, vector<1x256xf32>
    %55 = vector.shape_cast %54 : vector<1x256xf32> to vector<256xf32>
    %56 = vector.shape_cast %53 : vector<256xf32> to vector<1x256xf32>
    tpu.vector_store %arg3[%c1_19, %c0_20], %56 {strides = array<i32>} : memref<2x256xf32, #tpu.memory_space<vmem>>, vector<1x256xf32>,
    return
  }
}

</mosaic_0001>

<llo_original>
// kernel: tpu_custom_call.1
$region0: #{tpu_custom_call.1}
  #allocation0 [shape = 'u32[]', space=smem, size = 0x4, offset = 0x4, fixed_abs, tag = 'smem constant byte address 0x4 - core index']
  #allocation1 [shape = 'u32[144,128]{1,0:T(1,128)}', space=vmem, size = 0x12000, scoped, tag = 'internal scratch']
  #allocation2 [shape = 'f32[1]{0:T(128)S(6)}', space=smem, size = 0x200, scoped, tag = 'scoped memory for tpu_custom_call.1']
  %s0 = inlined_call_operand.vmem [shape: f32[4], index: 0, kind: input, shape index: {}]
  %s1 = inlined_call_operand.<no memory space> [shape: f32[1], index: 1, kind: input, shape index: {}]
  %s2 = inlined_call_operand.hbm [shape: f32[8,256], index: 2, kind: input, shape index: {}]
  %s3 = inlined_call_operand.hbm [shape: f32[2,256], index: 3, kind: output, shape index: {}]
  %s4 = sld [smem:[#allocation0]]
  $region30: #{tpu_custom_call.1} parent=0
    _
  %s6 = ssub.s32 1, %s4
  %s7 = scalar_select 0, %s6, %s4
  %8 = sst [smem:[#allocation2]] %s1
  $region1: #{tpu_custom_call.1} parent=0
    #allocation3 [shape = 'u8[512]{0}', space=smem, size = 0x200, scoped, tag = 'input window, operand 0, single buffered']
    #allocation4 [shape = 's32[1]{0}', space=sflag, size = 0x4, scoped, tag = 'scoped memory for tpu_custom_call.1']
    #allocation5 [shape = 's32[1]{0}', space=sflag, size = 0x4, scoped, tag = 'scoped memory for tpu_custom_call.1']
    #allocation6 [shape = 's32[1]{0}', space=sflag, size = 0x4, scoped, tag = 'scoped memory for tpu_custom_call.1']
    #allocation7 [shape = 'u8[8192]{0}', space=vmem, size = 0x2000, scoped, tag = 'input window, operand 2, single buffered']
    #allocation8 [shape = 'u8[2048]{0}', space=vmem, size = 0x800, scoped, tag = 'output window, operand 0, single buffered']
    %9 = vsyncpa [#allocation6], 0
    %10 = vsyncpa [#allocation4], 0
    %11 = vsyncpa [#allocation5], 0
    // Predicated region
    $region2: #{tpu_custom_call.1} parent=1 // pred_check
      _
    $region3: #{tpu_custom_call.1} parent=1 // pred_check_branch
      %13 = sbr.rel (0) target = $region5
    $region4: #{tpu_custom_call.1} parent=1 // pred_region
      %s15 = ssub.s32 16, 16
      %16 = vsyncadd [#allocation6], %s15
      %s18 = sshll.u32 %s0, 4
      %s19 = int_to_ptr.vmem [resolvable:$true] %s18
      %21 = dma.vmem_to_smem %s19, 16, [#allocation3], [#allocation6]
    $region5: #{tpu_custom_call.1} parent=1 // pred_fallthru
      _
    // Predicated region
    $region6: #{tpu_custom_call.1} parent=1 // pred_check
      _
    $region7: #{tpu_custom_call.1} parent=1 // pred_check_branch
      %23 = sbr.rel (0) target = $region9
    $region8: #{tpu_custom_call.1} parent=1 // pred_region
      _
    $region9: #{tpu_custom_call.1} parent=1 // pred_fallthru
      _
    // Predicated region
    $region10: #{tpu_custom_call.1} parent=1 // pred_check
      _
    $region11: #{tpu_custom_call.1} parent=1 // pred_check_branch
      %25 = sbr.rel (0) target = $region13
    $region12: #{tpu_custom_call.1} parent=1 // pred_region
      %s27 = ssub.s32 256, 256
      %28 = vsyncadd [#allocation4], %s27
      %s30 = sshll.u32 [#allocation7], 4
      %s31 = int_to_ptr.vmem [resolvable:$true] %s30
      %33 = dma.hbm_to_vmem [thread:$0]  %s2, 256, %s31, [#allocation4]
    $region13: #{tpu_custom_call.1} parent=1 // pred_fallthru
      _
    // Predicated region
    $region14: #{tpu_custom_call.1} parent=1 // pred_check
      _
    $region15: #{tpu_custom_call.1} parent=1 // pred_check_branch
      %35 = sbr.rel (0) target = $region17
    $region16: #{tpu_custom_call.1} parent=1 // pred_region
      %36 = dma.done [#allocation6], 16
    $region17: #{tpu_custom_call.1} parent=1 // pred_fallthru
      _
    // Predicated region
    $region18: #{tpu_custom_call.1} parent=1 // pred_check
      _
    $region19: #{tpu_custom_call.1} parent=1 // pred_check_branch
      %38 = sbr.rel (0) target = $region21
    $region20: #{tpu_custom_call.1} parent=1 // pred_region
      %39 = dma.done [#allocation4], 256
    $region21: #{tpu_custom_call.1} parent=1 // pred_fallthru
      _
    %40 = sfence
    %s41 = sld [smem:[#allocation2]]
    %v42 = vld [vmem:[#allocation7] ss:$8 sm:$0x3]
    %s43 = sld [smem:[#allocation3]]
    %v44 = vstv %s43
    %v45 = vmul.f32 %v42, %v44
    %s46 = scalar_lea.vmem [#allocation7], 1
    %v47 = vld [vmem:[%s46] ss:$8 sm:$0x3]
    %s48 = sld [smem:[#allocation3 + $0x1]]
    %v49 = vstv %s48
    %v50 = vmul.f32 %v47, %v49
    %s51 = scalar_lea.vmem [#allocation7], 2
    %v52 = vld [vmem:[%s51] ss:$8 sm:$0x3]
    %s53 = sld [smem:[#allocation3 + $0x2]]
    %v54 = vstv %s53
    %v55 = vmul.f32 %v52, %v54
    %v56 = vadd.f32 %v45, %v55
    %s57 = scalar_lea.vmem [#allocation7], 3
    %v58 = vld [vmem:[%s57] ss:$8 sm:$0x3]
    %s59 = sld [smem:[#allocation3 + $0x3]]
    %v60 = vstv %s59
    %v61 = vmul.f32 %v58, %v60
    %v62 = vadd.f32 %v50, %v61
    %v63 = vadd.f32 %v56, %v62
    %v64 = vstv %s41
    %v65 = vadd.f32 %v63, %v64
    %v66 = vlaneseq
    %vm67 = vcmp.ge.s32.totalorder %v66, 0
    %vm68 = vcmp.lt.s32.totalorder %v66, 256
    %vm69 = vmand %vm67, %vm68
    %70 = vst.msk [vmem:[#allocation8] ss:$2 sm:$0x3] %vm69, %v65
    %s71 = scalar_lea.vmem [#allocation7], 4
    %v72 = vld [vmem:[%s71] ss:$8 sm:$0x3]
    %s73 = sld [smem:[#allocation3]]
    %v74 = vstv %s73
    %v75 = vmul.f32 %v72, %v74
    %s76 = scalar_lea.vmem [#allocation7], 5
    %v77 = vld [vmem:[%s76] ss:$8 sm:$0x3]
    %s78 = sld [smem:[#allocation3 + $0x1]]
    %v79 = vstv %s78
    %v80 = vmul.f32 %v77, %v79
    %s81 = scalar_lea.vmem [#allocation7], 6
    %v82 = vld [vmem:[%s81] ss:$8 sm:$0x3]
    %s83 = sld [smem:[#allocation3 + $0x2]]
    %v84 = vstv %s83
    %v85 = vmul.f32 %v82, %v84
    %v86 = vadd.f32 %v75, %v85
    %s87 = scalar_lea.vmem [#allocation7], 7
    %v88 = vld [vmem:[%s87] ss:$8 sm:$0x3]
    %s89 = sld [smem:[#allocation3 + $0x3]]
    %v90 = vstv %s89
    %v91 = vmul.f32 %v88, %v90
    %v92 = vadd.f32 %v80, %v91
    %v93 = vadd.f32 %v86, %v92
    %v94 = vadd.f32 %v93, %v64
    %s95 = scalar_lea.vmem [#allocation8], 1
    %96 = vst.msk [vmem:[%s95] ss:$2 sm:$0x3] %vm69, %v94
    // Predicated region
    $region22: #{tpu_custom_call.1} parent=1 // pred_check
      _
    $region23: #{tpu_custom_call.1} parent=1 // pred_check_branch
      %98 = sbr.rel (0) target = $region25
    $region24: #{tpu_custom_call.1} parent=1 // pred_region
      %s100 = ssub.s32 64, 64
      %101 = vsyncadd [#allocation5], %s100
      %s103 = sshll.u32 [#allocation8], 4
      %s104 = int_to_ptr.vmem [resolvable:$true] %s103
      %106 = dma.vmem_to_hbm [thread:$0]  %s104, 64, %s3, [#allocation5]
    $region25: #{tpu_custom_call.1} parent=1 // pred_fallthru
      _
    // Predicated region
    $region26: #{tpu_custom_call.1} parent=1 // pred_check
      _
    $region27: #{tpu_custom_call.1} parent=1 // pred_check_branch
      %108 = sbr.rel (0) target = $region29
    $region28: #{tpu_custom_call.1} parent=1 // pred_region
      %109 = dma.done [#allocation5], 64
    $region29: #{tpu_custom_call.1} parent=1 // pred_fallthru
      _
    %110 = vsyncpa [#allocation4], 1
    %111 = vsyncpa [#allocation5], 1
    %112 = vsyncpa [#allocation6], 1

</llo_original>
